<compile_context>
chip_gen: v7x
topology: tpu7x:2x2x1
jax: 0.10.0
libtpu: 0.0.40
codegen_flags: <defaults>
</compile_context>

<pallas_src>
import functools

import jax
import jax.numpy as jnp
from jax.experimental import pallas as pl
from jax.experimental.pallas import tpu as pltpu

_NEG = float(jnp.finfo(jnp.float32).min)


def cross_model_kernel(n_rows,
                       hidden_ref, w_ref, b_ref, labels_ref, mask_ref,
                       logits_ref, loss_ref,
                       m_ref, num_ref, den_ref):
    # hidden_ref : (TILE_N, H)  encoder CLS hidden states (native dtype, e.g. bf16)
    # w_ref      : (1, H) f32   fc weight row (resident, constant index_map)
    # b_ref      : (1,)  f32    fc bias, SMEM scalar
    # labels_ref : (TILE_N, 1) f32
    # mask_ref   : (TILE_N, 1) f32  context_masks as {0., 1.}
    # logits_ref : (TILE_N, 1) f32  output logits column tile
    # loss_ref   : (1, 1) f32   scalar loss (written at last grid step only)
    # m/num/den  : (1, 1) f32   carried accumulators (running max, numerator, denominator)
    i = pl.program_id(0)
    tile_n = hidden_ref.shape[0]

    @pl.when(i == 0)
    def _init():
        m_ref[...] = jnp.full_like(m_ref, _NEG)
        num_ref[...] = jnp.zeros_like(num_ref)
        den_ref[...] = jnp.zeros_like(den_ref)

    # embedding = dropout(out)  -> identity in eval mode
    h = hidden_ref[...].astype(jnp.float32)            # (TILE_N, H)
    w = w_ref[...].astype(jnp.float32)                 # (1, H)
    b = b_ref[0]                                       # scalar from SMEM

    # logits = self.fc(embedding): output width 1 -> VPU multiply + lane reduce
    # (an (N,H)x(H,1) MXU matmul would use <1% of the systolic array).
    logits = jnp.sum(h * w, axis=-1, keepdims=True) + b   # (TILE_N, 1) f32
    logits_ref[...] = logits

    # Row-validity mask: rows beyond n_rows are block padding of the last tile.
    row = i * tile_n + jax.lax.broadcasted_iota(jnp.int32, (tile_n, 1), 0)
    valid = (row < n_rows) & (mask_ref[...] > 0.0)        # (TILE_N, 1) bool

    # Masked cross-ranking loss, accumulated with an online running max.
    # The max factor cancels exactly in num/den, so this matches
    #   -log( sum(exp(logits)*labels) / sum(exp(logits)) )  over masked entries,
    # but never overflows exp.
    s = jnp.where(valid, logits, _NEG)                    # (TILE_N, 1)
    tile_max = jnp.max(s, axis=0, keepdims=True)          # (1, 1)
    m_old = m_ref[...]
    m_new = jnp.maximum(m_old, tile_max)
    scale = jnp.exp(m_old - m_new)                        # rescale old partial sums
    e = jnp.where(valid, jnp.exp(s - m_new), 0.0)         # (TILE_N, 1)
    lab = jnp.where(valid, labels_ref[...], 0.0)

    num_ref[...] = num_ref[...] * scale + jnp.sum(e * lab, axis=0, keepdims=True)
    den_ref[...] = den_ref[...] * scale + jnp.sum(e, axis=0, keepdims=True)
    m_ref[...] = m_new

    @pl.when(i == pl.num_programs(0) - 1)
    def _finalize():
        # NOTE: if every entry is masked (den == 0) this yields inf/NaN,
        # matching the torch reference semantics.
        loss_ref[...] = -jnp.log(num_ref[...] / den_ref[...])


def cross_model_forward(hidden, fc_w, fc_b, labels, context_masks, *, tile_n=512):
    """hidden: (N, H) any float dtype (e.g. bf16 CLS states); fc_w: (1, H);
    fc_b: (1,); labels/context_masks: (B, P) with N == B*P."""
    N, H = hidden.shape
    B, P = labels.shape
    assert N == B * P

    # Tile rows: multiple of 8 (sublane), capped at tile_n; last tile may be padded.
    tn = min(tile_n, ((N + 7) // 8) * 8)
    grid = (pl.cdiv(N, tn),)

    w_row = fc_w.reshape(1, H).astype(jnp.float32)               # (1, H), resident
    b_smem = fc_b.reshape(1).astype(jnp.float32)                 # (1,) SMEM scalar
    labels_col = labels.reshape(N, 1).astype(jnp.float32)        # row-major == torch reshape(B,P)
    mask_col = context_masks.reshape(N, 1).astype(jnp.float32)

    kernel = functools.partial(cross_model_kernel, N)

    logits_col, loss = pl.pallas_call(
        kernel,
        grid=grid,
        in_specs=[
            pl.BlockSpec((tn, H), lambda i: (i, 0)),                 # hidden: streamed
            pl.BlockSpec((1, H), lambda i: (0, 0)),                  # weight: DMA'd once
            pl.BlockSpec(memory_space=pltpu.MemorySpace.SMEM),       # bias scalar
            pl.BlockSpec((tn, 1), lambda i: (i, 0)),                 # labels tile
            pl.BlockSpec((tn, 1), lambda i: (i, 0)),                 # mask tile
        ],
        out_specs=(
            pl.BlockSpec((tn, 1), lambda i: (i, 0)),                 # logits column
            pl.BlockSpec((1, 1), lambda i: (0, 0)),                  # scalar loss
        ),
        out_shape=(
            jax.ShapeDtypeStruct((N, 1), jnp.float32),
            jax.ShapeDtypeStruct((1, 1), jnp.float32),
        ),
        scratch_shapes=[
            pltpu.VMEM((1, 1), jnp.float32),   # running max
            pltpu.VMEM((1, 1), jnp.float32),   # numerator
            pltpu.VMEM((1, 1), jnp.float32),   # denominator
        ],
        compiler_params=pltpu.CompilerParams(
            # single grid axis carries the loss accumulators -> "arbitrary"
            dimension_semantics=("arbitrary",)),
    )(hidden, w_row, b_smem, labels_col, mask_col)

    # glue: torch does logits.reshape(labels.size(0), labels.size(1))
    logits = logits_col.reshape(B, P)
    return logits, loss[0, 0]


if __name__ == "__main__":
    # Small shapes: B=2 questions, P=13 passages each -> N=26 CLS embeddings,
    # hidden dim H=128 (stands in for 768).  N=26 with tile_n=8 exercises
    # multi-tile streaming, the carried loss accumulators, and the padded
    # last tile.
    B, P, H = 2, 13, 128
    N = B * P

    key = jax.random.PRNGKey(0)
    k_h, k_w, k_b, k_l, k_m = jax.random.split(key, 5)

    # encoder CLS output streamed in bf16 (its native dtype)
    hidden = jax.random.normal(k_h, (N, H), dtype=jnp.float32).astype(jnp.bfloat16)
    fc_w = 0.02 * jax.random.normal(k_w, (1, H), dtype=jnp.float32)     # nn.Linear(768,1).weight
    fc_b = 0.01 * jax.random.normal(k_b, (1,), dtype=jnp.float32)       # nn.Linear(768,1).bias
    labels = jax.random.uniform(k_l, (B, P), dtype=jnp.float32)         # soft relevance labels
    context_masks = (jax.random.uniform(k_m, (B, P)) > 0.3)             # bool mask
    # guarantee at least one unmasked, positively-labeled entry
    context_masks = context_masks.at[0, 0].set(True)

    # small tiles: multi-step grid + partial last tile
    logits, loss = cross_model_forward(hidden, fc_w, fc_b, labels, context_masks,
                                       tile_n=8)
    # default (single padded tile here; production path for large N)
    logits2, loss2 = cross_model_forward(hidden, fc_w, fc_b, labels, context_masks)
    jax.block_until_ready((logits, loss, logits2, loss2))

    # plain-JAX reference of the same math
    hidden_f32 = hidden.astype(jnp.float32)
    ref_logits = (hidden_f32 @ fc_w.T + fc_b).reshape(B, P)
    ref_exp = jnp.where(context_masks, jnp.exp(ref_logits), 0.0)
    ref_loss = -jnp.log(jnp.sum(ref_exp * labels) / jnp.sum(ref_exp))

    assert jnp.allclose(logits, ref_logits, atol=1e-5, rtol=1e-4), "logits mismatch"
    assert jnp.allclose(loss, ref_loss, atol=1e-5, rtol=1e-4), "loss mismatch"
    assert jnp.allclose(logits2, ref_logits, atol=1e-5, rtol=1e-4), "logits mismatch (default tile)"
    assert jnp.allclose(loss2, ref_loss, atol=1e-5, rtol=1e-4), "loss mismatch (default tile)"

    print("KERNEL_OK")
</pallas_src>

<mosaic_0001>
module attributes {stable_mosaic.version = 11 : i64} {
  func.func @cross_model_kernel(%arg0: i32, %arg1: memref<8x128xbf16, #tpu.memory_space<vmem>>, %arg2: memref<1x128xf32, #tpu.memory_space<vmem>>, %arg3: memref<1xf32, #tpu.memory_space<smem>>, %arg4: memref<8x1xf32, #tpu.memory_space<vmem>>, %arg5: memref<8x1xf32, #tpu.memory_space<vmem>>, %arg6: memref<8x1xf32, #tpu.memory_space<vmem>>, %arg7: memref<1x1xf32, #tpu.memory_space<vmem>>, %arg8: memref<1x1xf32, #tpu.memory_space<vmem>>, %arg9: memref<1x1xf32, #tpu.memory_space<vmem>>, %arg10: memref<1x1xf32, #tpu.memory_space<vmem>>) attributes {dimension_semantics = [#tpu.dimension_semantics<arbitrary>], iteration_bounds = array<i64: 4>, scalar_prefetch = 0 : i64, scratch_operands = 3 : i64, tpu.core_type = #tpu.core_type<tc>, window_params = [{transform_indices = @transform_0, window_bounds = array<i64: 8, 128>}, {pipeline_mode = #tpu.pipeline_mode<synchronous>, transform_indices = @transform_1, window_bounds = array<i64: 1, 128>}, {transform_indices = @transform_2, window_bounds = array<i64: 1>}, {transform_indices = @transform_3, window_bounds = array<i64: 8, 1>}, {transform_indices = @transform_4, window_bounds = array<i64: 8, 1>}, {transform_indices = @transform_5, window_bounds = array<i64: 8, 1>}, {pipeline_mode = #tpu.pipeline_mode<synchronous>, transform_indices = @transform_6, window_bounds = array<i64: 1, 1>}]} {
    %c0_i32 = arith.constant 0 : i32
    %0 = arith.cmpi eq, %arg0, %c0_i32 : i32
    %1 = arith.extui %0 : i1 to i32
    %c0_i32_0 = arith.constant 0 : i32
    %2 = arith.cmpi ne, %1, %c0_i32_0 : i32
    scf.if %2 {
      %cst_31 = arith.constant -3.40282347E+38 : f32
      %57 = vector.broadcast %cst_31 : f32 to vector<1x1xf32>
      %c0_32 = arith.constant 0 : index
      %c0_33 = arith.constant 0 : index
      %58 = vector.load %arg8[%c0_32, %c0_33] : memref<1x1xf32, #tpu.memory_space<vmem>>, vector<1x1xf32>
      tpu.vector_store %arg8[%c0_32, %c0_33], %57 {strides = array<i32>} : memref<1x1xf32, #tpu.memory_space<vmem>>, vector<1x1xf32>,
      %cst_34 = arith.constant 0.000000e+00 : f32
      %59 = vector.broadcast %cst_34 : f32 to vector<1x1xf32>
      %c0_35 = arith.constant 0 : index
      %c0_36 = arith.constant 0 : index
      %60 = vector.load %arg9[%c0_35, %c0_36] : memref<1x1xf32, #tpu.memory_space<vmem>>, vector<1x1xf32>
      tpu.vector_store %arg9[%c0_35, %c0_36], %59 {strides = array<i32>} : memref<1x1xf32, #tpu.memory_space<vmem>>, vector<1x1xf32>,
      %cst_37 = arith.constant 0.000000e+00 : f32
      %61 = vector.broadcast %cst_37 : f32 to vector<1x1xf32>
      %c0_38 = arith.constant 0 : index
      %c0_39 = arith.constant 0 : index
      %62 = vector.load %arg10[%c0_38, %c0_39] : memref<1x1xf32, #tpu.memory_space<vmem>>, vector<1x1xf32>
      tpu.vector_store %arg10[%c0_38, %c0_39], %61 {strides = array<i32>} : memref<1x1xf32, #tpu.memory_space<vmem>>, vector<1x1xf32>,
    } else {
    }
    %c0 = arith.constant 0 : index
    %c0_1 = arith.constant 0 : index
    %3 = vector.load %arg1[%c0, %c0_1] : memref<8x128xbf16, #tpu.memory_space<vmem>>, vector<8x128xbf16>
    %4 = arith.extf %3 : vector<8x128xbf16> to vector<8x128xf32>
    %c0_2 = arith.constant 0 : index
    %c0_3 = arith.constant 0 : index
    %5 = vector.load %arg2[%c0_2, %c0_3] : memref<1x128xf32, #tpu.memory_space<vmem>>, vector<1x128xf32>
    %c0_4 = arith.constant 0 : index
    %6 = memref.load %arg3[%c0_4] : memref<1xf32, #tpu.memory_space<smem>>
    %7 = vector.broadcast %5 : vector<1x128xf32> to vector<8x128xf32>
    %8 = arith.mulf %4, %7 : vector<8x128xf32>
    %cst = arith.constant dense<0.000000e+00> : vector<8xf32>
    %9 = vector.multi_reduction <add>, %8, %cst [1] : vector<8x128xf32> to vector<8xf32>
    %10 = vector.shape_cast %9 : vector<8xf32> to vector<8x1xf32>
    %11 = vector.broadcast %6 : f32 to vector<8x1xf32>
    %12 = arith.addf %10, %11 : vector<8x1xf32>
    %c0_5 = arith.constant 0 : index
    %c0_6 = arith.constant 0 : index
    %13 = vector.load %arg6[%c0_5, %c0_6] : memref<8x1xf32, #tpu.memory_space<vmem>>, vector<8x1xf32>
    tpu.vector_store %arg6[%c0_5, %c0_6], %12 {strides = array<i32>} : memref<8x1xf32, #tpu.memory_space<vmem>>, vector<8x1xf32>,
    %c8_i32 = arith.constant 8 : i32
    %14 = arith.muli %arg0, %c8_i32 : i32
    %15 = tpu.iota {dimensions = array<i32: 0>} : vector<8x1xi32>
    %16 = vector.broadcast %14 : i32 to vector<8x1xi32>
    %17 = arith.addi %16, %15 : vector<8x1xi32>
    %c26_i32 = arith.constant 26 : i32
    %18 = vector.broadcast %c26_i32 : i32 to vector<8x1xi32>
    %19 = arith.cmpi slt, %17, %18 : vector<8x1xi32>
    %c0_7 = arith.constant 0 : index
    %c0_8 = arith.constant 0 : index
    %20 = vector.load %arg5[%c0_7, %c0_8] : memref<8x1xf32, #tpu.memory_space<vmem>>, vector<8x1xf32>
    %cst_9 = arith.constant 0.000000e+00 : f32
    %21 = vector.broadcast %cst_9 : f32 to vector<8x1xf32>
    %22 = arith.cmpf ogt, %20, %21 : vector<8x1xf32>
    %23 = arith.andi %19, %22 : vector<8x1xi1>
    %cst_10 = arith.constant -3.40282347E+38 : f32
    %24 = vector.broadcast %cst_10 : f32 to vector<8x1xf32>
    %25 = arith.select %23, %12, %24 : vector<8x1xi1>, vector<8x1xf32>
    %cst_11 = arith.constant dense<0xFF800000> : vector<1xf32>
    %26 = vector.multi_reduction <maximumf>, %25, %cst_11 [0] : vector<8x1xf32> to vector<1xf32>
    %27 = vector.shape_cast %26 : vector<1xf32> to vector<1x1xf32>
    %c0_12 = arith.constant 0 : index
    %c0_13 = arith.constant 0 : index
    %28 = vector.load %arg8[%c0_12, %c0_13] : memref<1x1xf32, #tpu.memory_space<vmem>>, vector<1x1xf32>
    %29 = arith.maximumf %28, %27 : vector<1x1xf32>
    %30 = arith.subf %28, %29 : vector<1x1xf32>
    %31 = math.exp %30 : vector<1x1xf32>
    %32 = vector.broadcast %29 : vector<1x1xf32> to vector<8x1xf32>
    %33 = arith.subf %25, %32 : vector<8x1xf32>
    %34 = math.exp %33 : vector<8x1xf32>
    %cst_14 = arith.constant 0.000000e+00 : f32
    %35 = vector.broadcast %cst_14 : f32 to vector<8x1xf32>
    %36 = arith.select %23, %34, %35 : vector<8x1xi1>, vector<8x1xf32>
    %c0_15 = arith.constant 0 : index
    %c0_16 = arith.constant 0 : index
    %37 = vector.load %arg4[%c0_15, %c0_16] : memref<8x1xf32, #tpu.memory_space<vmem>>, vector<8x1xf32>
    %cst_17 = arith.constant 0.000000e+00 : f32
    %38 = vector.broadcast %cst_17 : f32 to vector<8x1xf32>
    %39 = arith.select %23, %37, %38 : vector<8x1xi1>, vector<8x1xf32>
    %c0_18 = arith.constant 0 : index
    %c0_19 = arith.constant 0 : index
    %40 = vector.load %arg9[%c0_18, %c0_19] : memref<1x1xf32, #tpu.memory_space<vmem>>, vector<1x1xf32>
    %41 = arith.mulf %40, %31 : vector<1x1xf32>
    %42 = arith.mulf %36, %39 : vector<8x1xf32>
    %cst_20 = arith.constant dense<0.000000e+00> : vector<1xf32>
    %43 = vector.multi_reduction <add>, %42, %cst_20 [0] : vector<8x1xf32> to vector<1xf32>
    %44 = vector.shape_cast %43 : vector<1xf32> to vector<1x1xf32>
    %45 = arith.addf %41, %44 : vector<1x1xf32>
    %c0_21 = arith.constant 0 : index
    %c0_22 = arith.constant 0 : index
    %46 = vector.load %arg9[%c0_21, %c0_22] : memref<1x1xf32, #tpu.memory_space<vmem>>, vector<1x1xf32>
    tpu.vector_store %arg9[%c0_21, %c0_22], %45 {strides = array<i32>} : memref<1x1xf32, #tpu.memory_space<vmem>>, vector<1x1xf32>,
    %c0_23 = arith.constant 0 : index
    %c0_24 = arith.constant 0 : index
    %47 = vector.load %arg10[%c0_23, %c0_24] : memref<1x1xf32, #tpu.memory_space<vmem>>, vector<1x1xf32>
    %48 = arith.mulf %47, %31 : vector<1x1xf32>
    %cst_25 = arith.constant dense<0.000000e+00> : vector<1xf32>
    %49 = vector.multi_reduction <add>, %36, %cst_25 [0] : vector<8x1xf32> to vector<1xf32>
    %50 = vector.shape_cast %49 : vector<1xf32> to vector<1x1xf32>
    %51 = arith.addf %48, %50 : vector<1x1xf32>
    %c0_26 = arith.constant 0 : index
    %c0_27 = arith.constant 0 : index
    %52 = vector.load %arg10[%c0_26, %c0_27] : memref<1x1xf32, #tpu.memory_space<vmem>>, vector<1x1xf32>
    tpu.vector_store %arg10[%c0_26, %c0_27], %51 {strides = array<i32>} : memref<1x1xf32, #tpu.memory_space<vmem>>, vector<1x1xf32>,
    %c0_28 = arith.constant 0 : index
    %c0_29 = arith.constant 0 : index
    %53 = vector.load %arg8[%c0_28, %c0_29] : memref<1x1xf32, #tpu.memory_space<vmem>>, vector<1x1xf32>
    tpu.vector_store %arg8[%c0_28, %c0_29], %29 {strides = array<i32>} : memref<1x1xf32, #tpu.memory_space<vmem>>, vector<1x1xf32>,
    %c3_i32 = arith.constant 3 : i32
    %54 = arith.cmpi eq, %arg0, %c3_i32 : i32
    %55 = arith.extui %54 : i1 to i32
    %c0_i32_30 = arith.constant 0 : i32
    %56 = arith.cmpi ne, %55, %c0_i32_30 : i32
    scf.if %56 {
      %c0_31 = arith.constant 0 : index
      %c0_32 = arith.constant 0 : index
      %57 = vector.load %arg9[%c0_31, %c0_32] : memref<1x1xf32, #tpu.memory_space<vmem>>, vector<1x1xf32>
      %c0_33 = arith.constant 0 : index
      %c0_34 = arith.constant 0 : index
      %58 = vector.load %arg10[%c0_33, %c0_34] : memref<1x1xf32, #tpu.memory_space<vmem>>, vector<1x1xf32>
      %59 = arith.divf %57, %58 : vector<1x1xf32>
      %60 = math.log %59 : vector<1x1xf32>
      %cst_35 = arith.constant 0.000000e+00 : f32
      %61 = vector.broadcast %cst_35 : f32 to vector<1x1xf32>
      %62 = arith.subf %61, %60 : vector<1x1xf32>
      %c0_36 = arith.constant 0 : index
      %c0_37 = arith.constant 0 : index
      %63 = vector.load %arg7[%c0_36, %c0_37] : memref<1x1xf32, #tpu.memory_space<vmem>>, vector<1x1xf32>
      tpu.vector_store %arg7[%c0_36, %c0_37], %62 {strides = array<i32>} : memref<1x1xf32, #tpu.memory_space<vmem>>, vector<1x1xf32>,
    } else {
    }
    return
  }
  func.func @transform_0(%arg0: i32) -> (i32, i32) {
    %c0_i32 = arith.constant 0 : i32
    %c0_i32_0 = arith.constant 0 : i32
    return %arg0, %c0_i32 : i32, i32
  }
  func.func @transform_1(%arg0: i32) -> (i32, i32) {
    %c0_i32 = arith.constant 0 : i32
    %c0_i32_0 = arith.constant 0 : i32
    %c0_i32_1 = arith.constant 0 : i32
    return %c0_i32, %c0_i32_0 : i32, i32
  }
  func.func @transform_2(%arg0: i32) -> i32 {
    %c0_i32 = arith.constant 0 : i32
    %c0_i32_0 = arith.constant 0 : i32
    return %c0_i32 : i32
  }
  func.func @transform_3(%arg0: i32) -> (i32, i32) {
    %c0_i32 = arith.constant 0 : i32
    %c0_i32_0 = arith.constant 0 : i32
    return %arg0, %c0_i32 : i32, i32
  }
  func.func @transform_4(%arg0: i32) -> (i32, i32) {
    %c0_i32 = arith.constant 0 : i32
    %c0_i32_0 = arith.constant 0 : i32
    return %arg0, %c0_i32 : i32, i32
  }
  func.func @transform_5(%arg0: i32) -> (i32, i32) {
    %c0_i32 = arith.constant 0 : i32
    %c0_i32_0 = arith.constant 0 : i32
    return %arg0, %c0_i32 : i32, i32
  }
  func.func @transform_6(%arg0: i32) -> (i32, i32) {
    %c0_i32 = arith.constant 0 : i32
    %c0_i32_0 = arith.constant 0 : i32
    %c0_i32_1 = arith.constant 0 : i32
    return %c0_i32, %c0_i32_0 : i32, i32
  }
}

</mosaic_0001>

<llo_original>
// kernel: tpu_custom_call.1
$region0: #{tpu_custom_call.1}
  #allocation0 [shape = 'u32[]', space=smem, size = 0x4, offset = 0x4, fixed_abs, tag = 'smem constant byte address 0x4 - core index']
  #allocation1 [shape = 'u32[144,128]{1,0:T(1,128)}', space=vmem, size = 0x12000, scoped, tag = 'internal scratch']
  #allocation2 [shape = 'f32[1,1]{1,0:T(1,128)}', space=vmem, size = 0x200, scoped, tag = 'scratch operand']
  #allocation3 [shape = 'f32[1,1]{1,0:T(1,128)}', space=vmem, size = 0x200, scoped, tag = 'scratch operand']
  #allocation4 [shape = 'f32[1,1]{1,0:T(1,128)}', space=vmem, size = 0x200, scoped, tag = 'scratch operand']
  #allocation5 [shape = 'f32[1]{0:T(128)S(6)}', space=smem, size = 0x200, scoped, tag = 'scoped memory for tpu_custom_call.1']
  %s0 = inlined_call_operand.vmem [shape: bf16[26,128], index: 0, kind: input, shape index: {}]
  %s1 = inlined_call_operand.vmem [shape: f32[1,128], index: 1, kind: input, shape index: {}]
  %s2 = inlined_call_operand.<no memory space> [shape: f32[1], index: 2, kind: input, shape index: {}]
  %s3 = inlined_call_operand.vmem [shape: f32[26,1], index: 3, kind: input, shape index: {}]
  %s4 = inlined_call_operand.vmem [shape: f32[26,1], index: 4, kind: input, shape index: {}]
  %s5 = inlined_call_operand.vmem [shape: f32[26,1], index: 5, kind: output, shape index: {0}]
  %s6 = inlined_call_operand.hbm [shape: f32[1,1], index: 6, kind: output, shape index: {1}]
  %7 = xla_tuple %s5, %s6
  %s8 = sld [smem:[#allocation0]]
  $region69: #{tpu_custom_call.1} parent=0
    _
  %s10 = ssub.s32 1, %s8
  %s11 = scalar_select 0, %s10, %s8
  %12 = sst [smem:[#allocation5]] %s2
  $region1: #{tpu_custom_call.1} parent=0
    #allocation6 [shape = 'u8[512]{0}', space=vmem, size = 0x400, scoped, tag = 'output window, operand 1, single buffered']
    #allocation7 [shape = 's32[2]{0}', space=sflag, size = 0x8, scoped, tag = 'scoped memory for tpu_custom_call.1']
    %13 = vsyncpa [#allocation7], 0
    loop: start=0, step=1, limit=6
    $region2: #{tpu_custom_call.1} parent=1 // loop_pre_header
      _
    $region3: #{tpu_custom_call.1} parent=1 // loop_header
      %s15 = sphi 0, %s19
      %p16 = scmp.ge.s32.totalorder %s15, 6
      %s25 = sphi 0, %s27
      %s28 = sphi 0, %s25
      %s29 = sphi 0, %s28
      %s45 = sphi 0, %s29
      %s49 = sphi 0, %s49
      %s51 = sphi 0, %s49
      %s52 = sphi 0, %s51
      %s66 = sphi 0, %s52
      %s70 = sphi 0, %s70
      %s72 = sphi 0, %s70
      %s73 = sphi 0, %s72
      %s87 = sphi 0, %s73
      %s93 = sphi 0, %s95
      %s96 = sphi 0, %s93
      %s97 = sphi 0, %s96
      %s113 = sphi 0, %s97
      %s119 = sphi 0, %s121
      %s122 = sphi 0, %s119
      %s123 = sphi 0, %s122
      %s139 = sphi 0, %s123
      %s145 = sphi 0, %s147
      %s148 = sphi 0, %s145
      %s149 = sphi 0, %s148
      %s165 = sphi 0, %s149
      %s169 = sphi 0, %s169
      %s171 = sphi 0, %s169
      %s172 = sphi 0, %s171
      %s186 = sphi 0, %s172
    $region4: #{tpu_custom_call.1} parent=1 // loop_header_branch
      %18 = sbr.rel (%p16) target = $region8
    $region5: #{tpu_custom_call.1} parent=1 // loop_body
      %s20 = ssub.s32 %s15, 1
      %s21 = ssub.s32 %s15, 2
      %s22 = sadd.s32 %s15, 1
      %s23 = ssub.s32 %s15, %s22
      %p24 = scmp.eq.s32.totalorder %s23, 0
      %s26 = sadd.s32 %s25, 1
      %s27 = scalar_select %p24, %s25, %s26
      %p30 = pneg %p24
      %p31 = scmp.eq.s32.totalorder %s15, 3
      %p32 = por %p30, %p31
      %p33 = scmp.ne.s32.totalorder %s25, %s28
      %p34 = scmp.eq.s32.totalorder %s15, 0
      %p35 = por %p33, %p34
      %p36 = scmp.ne.s32.totalorder %s25, %s28
      %p37 = scmp.eq.s32.totalorder %s20, 3
      %p38 = por %p36, %p37
      %p39 = scmp.ne.s32.totalorder %s28, %s29
      %p40 = scmp.eq.s32.totalorder %s20, 0
      %p41 = por %p39, %p40
      %p42 = scmp.ne.s32.totalorder %s28, %s29
      %p43 = scmp.eq.s32.totalorder %s21, 3
      %p44 = por %p42, %p43
      %p46 = scmp.ne.s32.totalorder %s29, %s45
      %p47 = scmp.eq.s32.totalorder %s21, 0
      %p48 = por %p46, %p47
      %s50 = sadd.s32 %s49, 1
      %p53 = scmp.eq.s32.totalorder %s15, 3
      %p54 = scmp.ne.s32.totalorder %s49, %s51
      %p55 = scmp.eq.s32.totalorder %s15, 0
      %p56 = por %p54, %p55
      %p57 = scmp.ne.s32.totalorder %s49, %s51
      %p58 = scmp.eq.s32.totalorder %s20, 3
      %p59 = por %p57, %p58
      %p60 = scmp.ne.s32.totalorder %s51, %s52
      %p61 = scmp.eq.s32.totalorder %s20, 0
      %p62 = por %p60, %p61
      %p63 = scmp.ne.s32.totalorder %s51, %s52
      %p64 = scmp.eq.s32.totalorder %s21, 3
      %p65 = por %p63, %p64
      %p67 = scmp.ne.s32.totalorder %s52, %s66
      %p68 = scmp.eq.s32.totalorder %s21, 0
      %p69 = por %p67, %p68
      %s71 = sadd.s32 %s70, 1
      %p74 = scmp.eq.s32.totalorder %s15, 3
      %p75 = scmp.ne.s32.totalorder %s70, %s72
      %p76 = scmp.eq.s32.totalorder %s15, 0
      %p77 = por %p75, %p76
      %p78 = scmp.ne.s32.totalorder %s70, %s72
      %p79 = scmp.eq.s32.totalorder %s20, 3
      %p80 = por %p78, %p79
      %p81 = scmp.ne.s32.totalorder %s72, %s73
      %p82 = scmp.eq.s32.totalorder %s20, 0
      %p83 = por %p81, %p82
      %p84 = scmp.ne.s32.totalorder %s72, %s73
      %p85 = scmp.eq.s32.totalorder %s21, 3
      %p86 = por %p84, %p85
      %p88 = scmp.ne.s32.totalorder %s73, %s87
      %p89 = scmp.eq.s32.totalorder %s21, 0
      %p90 = por %p88, %p89
      %s91 = ssub.s32 %s15, %s22
      %p92 = scmp.eq.s32.totalorder %s91, 0
      %s94 = sadd.s32 %s93, 1
      %s95 = scalar_select %p92, %s93, %s94
      %p98 = pneg %p92
      %p99 = scmp.eq.s32.totalorder %s15, 3
      %p100 = por %p98, %p99
      %p101 = scmp.ne.s32.totalorder %s93, %s96
      %p102 = scmp.eq.s32.totalorder %s15, 0
      %p103 = por %p101, %p102
      %p104 = scmp.ne.s32.totalorder %s93, %s96
      %p105 = scmp.eq.s32.totalorder %s20, 3
      %p106 = por %p104, %p105
      %p107 = scmp.ne.s32.totalorder %s96, %s97
      %p108 = scmp.eq.s32.totalorder %s20, 0
      %p109 = por %p107, %p108
      %p110 = scmp.ne.s32.totalorder %s96, %s97
      %p111 = scmp.eq.s32.totalorder %s21, 3
      %p112 = por %p110, %p111
      %p114 = scmp.ne.s32.totalorder %s97, %s113
      %p115 = scmp.eq.s32.totalorder %s21, 0
      %p116 = por %p114, %p115
      %s117 = ssub.s32 %s15, %s22
      %p118 = scmp.eq.s32.totalorder %s117, 0
      %s120 = sadd.s32 %s119, 1
      %s121 = scalar_select %p118, %s119, %s120
      %p124 = pneg %p118
      %p125 = scmp.eq.s32.totalorder %s15, 3
      %p126 = por %p124, %p125
      %p127 = scmp.ne.s32.totalorder %s119, %s122
      %p128 = scmp.eq.s32.totalorder %s15, 0
      %p129 = por %p127, %p128
      %p130 = scmp.ne.s32.totalorder %s119, %s122
      %p131 = scmp.eq.s32.totalorder %s20, 3
      %p132 = por %p130, %p131
      %p133 = scmp.ne.s32.totalorder %s122, %s123
      %p134 = scmp.eq.s32.totalorder %s20, 0
      %p135 = por %p133, %p134
      %p136 = scmp.ne.s32.totalorder %s122, %s123
      %p137 = scmp.eq.s32.totalorder %s21, 3
      %p138 = por %p136, %p137
      %p140 = scmp.ne.s32.totalorder %s123, %s139
      %p141 = scmp.eq.s32.totalorder %s21, 0
      %p142 = por %p140, %p141
      %s143 = ssub.s32 %s15, %s22
      %p144 = scmp.eq.s32.totalorder %s143, 0
      %s146 = sadd.s32 %s145, 1
      %s147 = scalar_select %p144, %s145, %s146
      %p150 = pneg %p144
      %p151 = scmp.eq.s32.totalorder %s15, 3
      %p152 = por %p150, %p151
      %p153 = scmp.ne.s32.totalorder %s145, %s148
      %p154 = scmp.eq.s32.totalorder %s15, 0
      %p155 = por %p153, %p154
      %p156 = scmp.ne.s32.totalorder %s145, %s148
      %p157 = scmp.eq.s32.totalorder %s20, 3
      %p158 = por %p156, %p157
      %p159 = scmp.ne.s32.totalorder %s148, %s149
      %p160 = scmp.eq.s32.totalorder %s20, 0
      %p161 = por %p159, %p160
      %p162 = scmp.ne.s32.totalorder %s148, %s149
      %p163 = scmp.eq.s32.totalorder %s21, 3
      %p164 = por %p162, %p163
      %p166 = scmp.ne.s32.totalorder %s149, %s165
      %p167 = scmp.eq.s32.totalorder %s21, 0
      %p168 = por %p166, %p167
      %s170 = sadd.s32 %s169, 1
      %p173 = scmp.eq.s32.totalorder %s15, 3
      %p174 = scmp.ne.s32.totalorder %s169, %s171
      %p175 = scmp.eq.s32.totalorder %s15, 0
      %p176 = por %p174, %p175
      %p177 = scmp.ne.s32.totalorder %s169, %s171
      %p178 = scmp.eq.s32.totalorder %s20, 3
      %p179 = por %p177, %p178
      %p180 = scmp.ne.s32.totalorder %s171, %s172
      %p181 = scmp.eq.s32.totalorder %s20, 0
      %p182 = por %p180, %p181
      %p183 = scmp.ne.s32.totalorder %s171, %s172
      %p184 = scmp.eq.s32.totalorder %s21, 3
      %p185 = por %p183, %p184
      %p187 = scmp.ne.s32.totalorder %s172, %s186
      %p188 = scmp.eq.s32.totalorder %s21, 0
      %p189 = por %p187, %p188
      %p190 = scmp.le.s32.totalorder 1, %s15
      %p191 = scmp.lt.s32.totalorder %s15, 5
      %p192 = pnand %p190, %p191
      %p193 = pneg %p192
      // Predicated region
      $region9: #{tpu_custom_call.1} parent=5 // pred_check
        _
      $region10: #{tpu_custom_call.1} parent=5 // pred_check_branch
        %195 = sbr.rel (%p192) target = $region12
      $region11: #{tpu_custom_call.1} parent=5 // pred_region
        %s196 = ssub.s32 %s15, 1
        // Predicated region
        $region13: #{tpu_custom_call.1} parent=11 // pred_check
          %p197 = pneg %p62
        $region14: #{tpu_custom_call.1} parent=11 // pred_check_branch
          %199 = sbr.rel (%p197) target = $region16
        $region15: #{tpu_custom_call.1} parent=11 // pred_region
          _
        $region16: #{tpu_custom_call.1} parent=11 // pred_fallthru
          _
        // Predicated region
        $region17: #{tpu_custom_call.1} parent=11 // pred_check
          %p200 = pneg %p83
        $region18: #{tpu_custom_call.1} parent=11 // pred_check_branch
          %202 = sbr.rel (%p200) target = $region20
        $region19: #{tpu_custom_call.1} parent=11 // pred_region
          _
        $region20: #{tpu_custom_call.1} parent=11 // pred_fallthru
          _
      $region12: #{tpu_custom_call.1} parent=5 // pred_fallthru
        _
      %p203 = scmp.lt.s32.totalorder %s15, 4
      // Predicated region
      $region21: #{tpu_custom_call.1} parent=5 // pred_check
        %p204 = pneg %p203
      $region22: #{tpu_custom_call.1} parent=5 // pred_check_branch
        %206 = sbr.rel (%p204) target = $region24
      $region23: #{tpu_custom_call.1} parent=5 // pred_region
        // Predicated region
        $region25: #{tpu_custom_call.1} parent=23 // pred_check
          %p207 = pneg %p35
        $region26: #{tpu_custom_call.1} parent=23 // pred_check_branch
          %209 = sbr.rel (%p207) target = $region28
        $region27: #{tpu_custom_call.1} parent=23 // pred_region
          %p210 = scmp.lt.s32.totalorder %s15, 3
          %s211 = scalar_select %p210, %s15, 3
          %s212 = smul.addr %s211, 4
          %s213 = scalar_lea.vmem %s0, %s212
        $region28: #{tpu_custom_call.1} parent=23 // pred_fallthru
          _
        // Predicated region
        $region29: #{tpu_custom_call.1} parent=23 // pred_check
          %p214 = pneg %p103
        $region30: #{tpu_custom_call.1} parent=23 // pred_check_branch
          %216 = sbr.rel (%p214) target = $region32
        $region31: #{tpu_custom_call.1} parent=23 // pred_region
          %p217 = scmp.lt.s32.totalorder %s15, 3
          %s218 = scalar_select %p217, %s15, 3
          %s219 = smul.addr %s218, 8
          %s220 = scalar_lea.vmem %s3, %s219
        $region32: #{tpu_custom_call.1} parent=23 // pred_fallthru
          _
        // Predicated region
        $region33: #{tpu_custom_call.1} parent=23 // pred_check
          %p221 = pneg %p129
        $region34: #{tpu_custom_call.1} parent=23 // pred_check_branch
          %223 = sbr.rel (%p221) target = $region36
        $region35: #{tpu_custom_call.1} parent=23 // pred_region
          %p224 = scmp.lt.s32.totalorder %s15, 3
          %s225 = scalar_select %p224, %s15, 3
          %s226 = smul.addr %s225, 8
          %s227 = scalar_lea.vmem %s4, %s226
        $region36: #{tpu_custom_call.1} parent=23 // pred_fallthru
          _
      $region24: #{tpu_custom_call.1} parent=5 // pred_fallthru
        _
      %p228 = scmp.le.s32.totalorder 1, %s15
      %p229 = scmp.lt.s32.totalorder %s15, 5
      %p230 = pnand %p228, %p229
      %p231 = pneg %p230
      // Predicated region
      $region37: #{tpu_custom_call.1} parent=5 // pred_check
        _
      $region38: #{tpu_custom_call.1} parent=5 // pred_check_branch
        %233 = sbr.rel (%p230) target = $region40
      $region39: #{tpu_custom_call.1} parent=5 // pred_region
        %s234 = ssub.s32 %s15, 1
        %p235 = scmp.lt.s32.totalorder %s20, 3
        %s236 = scalar_select %p235, %s20, 3
        %s237 = smul.addr %s236, 4
        %s238 = scalar_lea.vmem %s0, %s237
        %p239 = pneg %p41
        %p240 = pneg %p38
        %p241 = pneg %p62
        %p242 = pneg %p59
        %p243 = pneg %p83
        %p244 = pneg %p80
        %p245 = scmp.lt.s32.totalorder %s20, 3
        %s246 = scalar_select %p245, %s20, 3
        %s247 = smul.addr %s246, 8
        %s248 = scalar_lea.vmem %s3, %s247
        %p249 = pneg %p109
        %p250 = pneg %p106
        %p251 = scmp.lt.s32.totalorder %s20, 3
        %s252 = scalar_select %p251, %s20, 3
        %s253 = smul.addr %s252, 8
        %s254 = scalar_lea.vmem %s4, %s253
        %p255 = pneg %p135
        %p256 = pneg %p132
        %p257 = pneg %p161
        %p258 = pneg %p158
        %p259 = scmp.lt.s32.totalorder %s20, 3
        %s260 = scalar_select %p259, %s20, 3
        %s261 = smul.addr %s260, 8
        %s262 = scalar_lea.vmem %s5, %s261
        %p263 = pneg %p182
        %p264 = pneg %p179
        %p265 = scmp.lt.s32.totalorder %s20, 3
        %s266 = scalar_select %p265, %s20, 3
        %s267 = smul.addr %s266, 4
        %s268 = scalar_lea.vmem %s0, %s267
        %p269 = scmp.lt.s32.totalorder %s20, 3
        %s270 = scalar_select %p269, %s20, 3
        %s271 = smul.addr %s270, 8
        %s272 = scalar_lea.vmem %s3, %s271
        %p273 = scmp.lt.s32.totalorder %s20, 3
        %s274 = scalar_select %p273, %s20, 3
        %s275 = smul.addr %s274, 8
        %s276 = scalar_lea.vmem %s4, %s275
        %p277 = scmp.lt.s32.totalorder %s20, 3
        %s278 = scalar_select %p277, %s20, 3
        %s279 = smul.addr %s278, 8
        %s280 = scalar_lea.vmem %s5, %s279
        %p281 = scmp.eq.s32.totalorder %s20, 0
        // Predicated region
        $region41: #{tpu_custom_call.1} parent=39 // pred_check
          %p282 = pneg %p281
        $region42: #{tpu_custom_call.1} parent=39 // pred_check_branch
          %284 = sbr.rel (%p282) target = $region44
        $region43: #{tpu_custom_call.1} parent=39 // pred_region
          %vm285 = vcmask 0
          %286 = vst.msk [vmem:[#allocation2] sm:$0x1] %vm285, -3.4028235e+38
          %287 = vst.msk [vmem:[#allocation3] sm:$0x1] %vm285, 0.0
          %288 = vst.msk [vmem:[#allocation4] sm:$0x1] %vm285, 0.0
        $region44: #{tpu_custom_call.1} parent=39 // pred_fallthru
          _
        %v289 = vld [vmem:[%s268] sm:$0xf]
        %v290 = vunpack.c.l.bf16 %v289
        %v291 = vld [vmem:[%s1] sm:$0x1]
        %s292 = sld [smem:[#allocation5]]
        %v294 = vlaneseq
        %v295 = vshrl.u32 %v294, 7
        %v296 = vsub.s32 0, %v295
        %v297 = vrot.slane %v291, %v296
        %v299 = vmul.f32 %v290, %v297
        %300 = vadd.xlane.f32.xlu0 %v299
        %v301 = vpop.xlane.xlu0 %300
        %v302 = vstv %s292
        %v303 = vadd.f32 %v301, %v302
        %vm304 = vcmask 7168
        %305 = vst.msk [vmem:[%s280] sm:$0xff] %vm304, %v303
        %s306 = smul.u32 %s20, 8
        %v307 = vlaneseq
        %v308 = vshrl.u32 %v307, 7
        %v309 = vstv %s306
        %v310 = vadd.s32 %v309, %v308
        %vm311 = vcmp.lt.s32.totalorder %v310, 26
        %v312 = vld [vmem:[%s276] sm:$0xff]
        %vm313 = vcmp.gt.f32.partialorder %v312, 0.0
        %vm314 = vmand %vm311, %vm313
        %v315 = vsel %vm314, %v303, -3.4028235e+38
        %v316 = vsel %vm304, %v315, -inf
        %v317 = vrot.slane %v316, 4
        %v318 = vmax.f32 %v316, %v317
        %v319 = vrot.slane %v318, 2
        %v320 = vmax.f32 %v318, %v319
        %v321 = vrot.slane %v320, 1
        %v322 = vmax.f32 %v320, %v321
        %v323 = vld [vmem:[#allocation2] sm:$0x1]
        %v324 = vmax.f32 %v323, %v322
        %v325 = vsub.f32 %v323, %v324
        %v326 = vmul.f32 %v325, 1.442695
        %v327 = vpow.pop %v326
        %v329 = vlaneseq
        %v330 = vshrl.u32 %v329, 7
        %v331 = vsub.s32 0, %v330
        %v332 = vrot.slane %v324, %v331
        %v334 = vsub.f32 %v315, %v332
        %v335 = vmul.f32 %v334, 1.442695
        %v336 = vpow.pop %v335
        %v337 = vsel %vm314, %v336, 0.0
        %v338 = vld [vmem:[%s272] sm:$0xff]
        %v339 = vsel %vm314, %v338, 0.0
        %v340 = vld [vmem:[#allocation3] sm:$0x1]
        %v341 = vmul.f32 %v340, %v327
        %v342 = vmul.f32 %v337, %v339
        %v343 = vsel %vm304, %v342, 0.0
        %v344 = vrot.slane %v343, 4
        %v345 = vadd.f32 %v343, %v344
        %v346 = vrot.slane %v345, 2
        %v347 = vadd.f32 %v345, %v346
        %v348 = vrot.slane %v347, 1
        %v349 = vadd.f32 %v347, %v348
        %v350 = vadd.f32 %v341, %v349
        %vm351 = vcmask 0
        %352 = vst.msk [vmem:[#allocation3] sm:$0x1] %vm351, %v350
        %v353 = vld [vmem:[#allocation4] sm:$0x1]
        %v354 = vmul.f32 %v353, %v327
        %v355 = vsel %vm304, %v337, 0.0
        %v356 = vrot.slane %v355, 4
        %v357 = vadd.f32 %v355, %v356
        %v358 = vrot.slane %v357, 2
        %v359 = vadd.f32 %v357, %v358
        %v360 = vrot.slane %v359, 1
        %v361 = vadd.f32 %v359, %v360
        %v362 = vadd.f32 %v354, %v361
        %363 = vst.msk [vmem:[#allocation4] sm:$0x1] %vm351, %v362
        %364 = vst.msk [vmem:[#allocation2] sm:$0x1] %vm351, %v324
        %p365 = scmp.eq.s32.totalorder %s20, 3
        // Predicated region
        $region45: #{tpu_custom_call.1} parent=39 // pred_check
          %p366 = pneg %p365
        $region46: #{tpu_custom_call.1} parent=39 // pred_check_branch
          %368 = sbr.rel (%p366) target = $region48
        $region47: #{tpu_custom_call.1} parent=39 // pred_region
          %v369 = vld [vmem:[#allocation3] sm:$0x1]
          %v370 = vld [vmem:[#allocation4] sm:$0x1]
          %v371 = vrcp.pop %v370
          %v372 = vmul.f32 %v369, %v371
          %v373 = vlog2.pop %v372
          %v374 = vmul.f32 %v373, 0.6931472
          %v375 = vsub.f32 0.0, %v374
          %376 = vst.msk [vmem:[#allocation6] sm:$0x1] %vm351, %v375
        $region48: #{tpu_custom_call.1} parent=39 // pred_fallthru
          _
        %p377 = scmp.lt.s32.totalorder %s20, 3
        %s378 = scalar_select %p377, %s20, 3
        %s379 = smul.addr %s378, 8
        %s380 = scalar_lea.vmem %s5, %s379
        // Predicated region
        $region49: #{tpu_custom_call.1} parent=39 // pred_check
          %p381 = pneg %p158
        $region50: #{tpu_custom_call.1} parent=39 // pred_check_branch
          %383 = sbr.rel (%p381) target = $region52
        $region51: #{tpu_custom_call.1} parent=39 // pred_region
          _
        $region52: #{tpu_custom_call.1} parent=39 // pred_fallthru
          _
        // Predicated region
        $region53: #{tpu_custom_call.1} parent=39 // pred_check
          %p384 = pneg %p179
        $region54: #{tpu_custom_call.1} parent=39 // pred_check_branch
          %386 = sbr.rel (%p384) target = $region56
        $region55: #{tpu_custom_call.1} parent=39 // pred_region
          %s388 = ssub.s32 16, 16
          %389 = vsyncadd [#allocation7], %s388
          %s391 = sshll.u32 [#allocation6], 4
          %s392 = int_to_ptr.vmem [resolvable:$true] %s391
          %394 = dma.vmem_to_hbm [thread:$0]  %s392, 16, %s6, [#allocation7]
        $region56: #{tpu_custom_call.1} parent=39 // pred_fallthru
          _
        // Predicated region
        $region57: #{tpu_custom_call.1} parent=39 // pred_check
          %p395 = pneg %p179
        $region58: #{tpu_custom_call.1} parent=39 // pred_check_branch
          %397 = sbr.rel (%p395) target = $region60
        $region59: #{tpu_custom_call.1} parent=39 // pred_region
          %398 = dma.done [#allocation7], 16
        $region60: #{tpu_custom_call.1} parent=39 // pred_fallthru
          _
      $region40: #{tpu_custom_call.1} parent=5 // pred_fallthru
        _
      %p399 = scmp.le.s32.totalorder 2, %s15
      // Predicated region
      $region61: #{tpu_custom_call.1} parent=5 // pred_check
        %p400 = pneg %p399
      $region62: #{tpu_custom_call.1} parent=5 // pred_check_branch
        %402 = sbr.rel (%p400) target = $region64
      $region63: #{tpu_custom_call.1} parent=5 // pred_region
        %s403 = ssub.s32 %s15, 2
        // Predicated region
        $region65: #{tpu_custom_call.1} parent=63 // pred_check
          %p404 = pneg %p164
        $region66: #{tpu_custom_call.1} parent=63 // pred_check_branch
          %406 = sbr.rel (%p404) target = $region68
        $region67: #{tpu_custom_call.1} parent=63 // pred_region
          %p407 = scmp.lt.s32.totalorder %s21, 3
          %s408 = scalar_select %p407, %s21, 3
          %s409 = smul.addr %s408, 8
          %s410 = scalar_lea.vmem %s5, %s409
        $region68: #{tpu_custom_call.1} parent=63 // pred_fallthru
          _
      $region64: #{tpu_custom_call.1} parent=5 // pred_fallthru
        _
    $region6: #{tpu_custom_call.1} parent=1 // loop_footer
      %s19 = sadd.s32 1, %s15
    $region7: #{tpu_custom_call.1} parent=1 // loop_footer_branch
      %14 = sbr.rel target = $region3
    $region8: #{tpu_custom_call.1} parent=1 // loop_exit
      _
    %411 = vsyncpa [#allocation7], 1
    %s412 = scalar_lea.sflag [#allocation7], 1
    %413 = vsyncpa %s412, 1

</llo_original>
